<compile_context>
chip_gen: v5e
topology: v5e:2x2
jax: 0.10.0
libtpu: 0.0.40
codegen_flags: <defaults>
</compile_context>

<pallas_src>
import functools

import jax
import jax.numpy as jnp
import numpy as np
from jax.experimental import pallas as pl
from jax.experimental.pallas import tpu as pltpu


# ------------------------------ Pallas kernel ------------------------------

def _residual_block_kernel(xm_ref, w_ref, vec_ref, o_ref, rhs1_ref, rhs2_ref,
                           *, cin_p, cout_p, cout, k, wp, s_off, w_out):
    """One step = B_TILE images packed along lanes.

    Layout (channels on sublanes, row-extended flat spatial on lanes):
      xm_ref : (cin_p+1, Win)  f32, rows [0,cin_p) = zero-padded input channels,
               row cin_p = 1.0/0.0 mask of real-pixel positions. Win = w_out + 4S.
      w_ref  : (cout_p, k*k*cin_p + k*k*cout_p + cin_p) bf16: [w1 | w2 | w_skip]
      vec_ref: (max(cin_p,cout_p), 5) f32 columns [s1, t1, s2, t2+b1*s2, b2+br]
      o_ref  : (cout, w_out) f32, w_out a multiple of 128 (lane-dense stores).
    """
    S = s_off
    n_w1 = k * k * cin_p
    w1_width = w_out + 2 * S                         # conv1 output width

    x = xm_ref[:cin_p, :]                            # (cin_p, Win) f32
    m0 = xm_ref[cin_p:cin_p + 1, :]                  # (1, Win) real-pixel mask

    s1 = vec_ref[:cin_p, 0:1]
    t1 = vec_ref[:cin_p, 1:2]
    s2 = vec_ref[:cout_p, 2:3]
    t2 = vec_ref[:cout_p, 3:4]                       # t2' = t2 + b1*s2  (b1 folded in)
    bo = vec_ref[:cout, 4:5]                         # b2 + br

    taps = [dy * wp + dx for dy in range(k) for dx in range(k)]

    # BN1 (inference affine) + ReLU; the mask re-zeroes pad/margin positions so the
    # convolution's implicit zero padding stays exact after the affine shift.
    h1 = jnp.maximum(x * s1 + t1, 0.0) * m0          # (cin_p, Win) f32

    # conv1: stack the k*k lane-shifted slices on the contraction axis (aligned 8-row
    # pieces in a VMEM scratch) -> a single deep MXU matmul.
    for t, off in enumerate(taps):
        rhs1_ref[t * cin_p:(t + 1) * cin_p, :] = h1[:, off:off + w1_width]
    a1 = jnp.dot(w_ref[:, :n_w1], rhs1_ref[...].astype(jnp.bfloat16),
                 preferred_element_type=jnp.float32)          # (cout_p, W1)

    # BN2 (+ folded conv1 bias) + ReLU; m1 is m0 shifted by S.
    m1 = xm_ref[cin_p:cin_p + 1, S:S + w1_width]
    h2 = jnp.maximum(a1 * s2 + t2, 0.0) * m1                   # (cout_p, W1) f32

    # conv2 + 1x1 projection skip fused into ONE matmul: im2col of h2 plus the raw-input
    # rows, against [w2 | w_skip].
    for t, off in enumerate(taps):
        rhs2_ref[t * cout_p:(t + 1) * cout_p, :] = h2[:, off:off + w_out]
    rhs2_ref[k * k * cout_p:, :] = xm_ref[:cin_p, 2 * S:2 * S + w_out]
    o_ref[...] = jnp.dot(w_ref[:cout, n_w1:], rhs2_ref[...].astype(jnp.bfloat16),
                         preferred_element_type=jnp.float32) + bo


# --------------------------------- wrapper ---------------------------------

def _round_up(a, m):
    return -(-a // m) * m


def residual_block_forward(x, params, *, eps=1e-5, b_tile=None):
    """ResidualBlock forward (downsample=False, projection skip) for NCHW input x."""
    B, Cin, H, W = x.shape
    Cout, _, k, _ = params["w1"].shape
    p = k // 2
    Wp = W + 2 * p                     # each spatial row keeps its right-hand zero pad
    L = H * Wp                         # flat spatial length of one image
    S = p * Wp + p                     # flat offset of pixel (0,0) inside the padded image
    M = L + 4 * S                      # per-image frame width (stride along lanes)

    cin_p = _round_up(Cin, 8)          # pad channels so im2col pieces are 8-row aligned
    cout_p = _round_up(Cout, 8)
    cmax = max(cin_p, cout_p)

    # Images per grid step: keep >=2 steps (both v7x TensorCores busy) and a VMEM-friendly
    # lane-slab width; pack as many images as possible otherwise.
    if b_tile is None:
        b_tile = max(1, min(-(-B // 2), 8192 // M))
    num_steps = -(-B // b_tile)
    Bp = num_steps * b_tile

    Wout = _round_up(b_tile * M - 4 * S, 128)   # lane-dense output block width
    Win = Wout + 4 * S                          # input slab width (incl. zero slack)
    W1 = Wout + 2 * S                           # conv1 output width

    f32 = jnp.float32

    # ---- fold BatchNorms / biases into per-channel scale & shift, pack into one array ----
    s1 = params["g1"] / jnp.sqrt(params["v1"] + eps)
    t1 = params["beta1"] - params["m1"] * s1
    s2 = params["g2"] / jnp.sqrt(params["v2"] + eps)
    t2 = params["beta2"] - params["m2"] * s2
    t2p = t2 + params["b1"] * s2                # conv1 bias folded into BN2 shift
    bo = params["b2"] + params["br"]            # conv2 bias + skip bias

    def col(v):
        v = v.astype(f32).reshape(-1)
        return jnp.pad(v, (0, cmax - v.shape[0])).reshape(cmax, 1)

    vecs = jnp.concatenate([col(s1), col(t1), col(s2), col(t2p), col(bo)], axis=1)  # (cmax,5)

    # ---- pack conv weights (tap-major, cin-minor columns) into one bf16 slab ----
    n1 = k * k * cin_p
    w1r = jnp.transpose(params["w1"], (0, 2, 3, 1)).reshape(Cout, k * k, Cin)
    w1p = jnp.pad(w1r, ((0, cout_p - Cout), (0, 0), (0, cin_p - Cin))).reshape(cout_p, n1)
    w2r = jnp.transpose(params["w2"], (0, 2, 3, 1)).reshape(Cout, k * k, Cout)
    w2p = jnp.pad(w2r, ((0, 0), (0, 0), (0, cout_p - Cout))).reshape(Cout, k * k * cout_p)
    wrp = jnp.pad(params["wr"].reshape(Cout, Cin), ((0, 0), (0, cin_p - Cin)))
    w2full = jnp.pad(jnp.concatenate([w2p, wrp], axis=1), ((0, cout_p - Cout), (0, 0)))
    wall = jnp.concatenate([w1p, w2full], axis=1).astype(jnp.bfloat16)   # (cout_p, n1+n2)

    # ---- build the per-step input slab: (steps, cin_p + 1 mask row, Win) ----
    xp = jnp.pad(x.astype(f32),
                 ((0, Bp - B), (0, cin_p - Cin), (0, 0), (0, 2 * p)))     # (Bp,cin_p,H,Wp)
    xp = xp.reshape(Bp, cin_p, L)
    xp = jnp.pad(xp, ((0, 0), (0, 0), (2 * S, 2 * S)))                    # (Bp,cin_p,M)
    xp = xp.reshape(num_steps, b_tile, cin_p, M).transpose(0, 2, 1, 3)
    xp = xp.reshape(num_steps, cin_p, b_tile * M)
    xp = jnp.pad(xp, ((0, 0), (0, 0), (0, Win - b_tile * M)))             # (steps,cin_p,Win)

    j = np.arange(Win)
    fpos = j % M
    mask_np = ((fpos >= 2 * S) & (fpos < 2 * S + L) & ((fpos - 2 * S) % Wp < W)
               & (j < b_tile * M)).astype(np.float32)
    mask = jnp.broadcast_to(jnp.asarray(mask_np).reshape(1, 1, Win), (num_steps, 1, Win))
    xe = jnp.concatenate([xp, mask], axis=1)                              # (steps,cin_p+1,Win)

    kernel = functools.partial(
        _residual_block_kernel, cin_p=cin_p, cout_p=cout_p, cout=Cout,
        k=k, wp=Wp, s_off=S, w_out=Wout)

    out = pl.pallas_call(
        kernel,
        out_shape=jax.ShapeDtypeStruct((num_steps, Cout, Wout), jnp.float32),
        grid=(num_steps,),
        in_specs=[
            pl.BlockSpec((None, cin_p + 1, Win), lambda s: (s, 0, 0)),   # input slab + mask
            pl.BlockSpec((cout_p, wall.shape[1]), lambda s: (0, 0)),     # packed weights
            pl.BlockSpec((cmax, 5), lambda s: (0, 0)),                   # packed BN/bias vecs
        ],
        out_specs=pl.BlockSpec((None, Cout, Wout), lambda s: (s, 0, 0)),
        scratch_shapes=[
            pltpu.VMEM((k * k * cin_p, W1), jnp.float32),                # conv1 im2col
            pltpu.VMEM((k * k * cout_p + cin_p, Wout), jnp.float32),     # conv2+skip im2col
        ],
        compiler_params=pltpu.CompilerParams(dimension_semantics=("parallel",)),
    )(xe, wall, vecs)

    # ---- un-pack: (steps, Cout, Wout) -> (B, Cout, H, W) ----
    full = b_tile * M
    if Wout < full:
        out = jnp.pad(out, ((0, 0), (0, 0), (0, full - Wout)))
    out = out[:, :, :full].reshape(num_steps, Cout, b_tile, M)[:, :, :, :L]
    out = out.reshape(num_steps, Cout, b_tile, H, Wp)[:, :, :, :, :W]
    out = out.transpose(0, 2, 1, 3, 4).reshape(Bp, Cout, H, W)
    return out[:B]


# ------------------------------ params / reference ------------------------------

def init_params(key, Cin, Cout, k):
    """Deterministic synthetic params (PyTorch-style init; BN uses running stats)."""
    ks = jax.random.split(key, 14)

    def u(kk, shape, fan_in):
        b = 1.0 / np.sqrt(fan_in)
        return jax.random.uniform(kk, shape, jnp.float32, -b, b)

    return dict(
        g1=jax.random.uniform(ks[0], (Cin,), jnp.float32, 0.5, 1.5),
        beta1=0.2 * jax.random.normal(ks[1], (Cin,), jnp.float32),
        m1=0.2 * jax.random.normal(ks[2], (Cin,), jnp.float32),
        v1=jax.random.uniform(ks[3], (Cin,), jnp.float32, 0.5, 1.5),
        w1=u(ks[4], (Cout, Cin, k, k), Cin * k * k),
        b1=u(ks[5], (Cout,), Cin * k * k),
        g2=jax.random.uniform(ks[6], (Cout,), jnp.float32, 0.5, 1.5),
        beta2=0.2 * jax.random.normal(ks[7], (Cout,), jnp.float32),
        m2=0.2 * jax.random.normal(ks[8], (Cout,), jnp.float32),
        v2=jax.random.uniform(ks[9], (Cout,), jnp.float32, 0.5, 1.5),
        w2=u(ks[10], (Cout, Cout, k, k), Cout * k * k),
        b2=u(ks[11], (Cout,), Cout * k * k),
        wr=u(ks[12], (Cout, Cin, 1, 1), Cin),
        br=u(ks[13], (Cout,), Cin),
    )


def reference_forward(x, params, *, eps=1e-5):
    """Pure-JAX (lax.conv) reference of the same inference-mode forward pass."""
    def bn(h, g, beta, m, v):
        g, beta, m, v = (a.reshape(1, -1, 1, 1) for a in (g, beta, m, v))
        return g * (h - m) / jnp.sqrt(v + eps) + beta

    def conv(h, w, b, pad):
        out = jax.lax.conv_general_dilated(
            h, w, window_strides=(1, 1), padding=[(pad, pad), (pad, pad)],
            dimension_numbers=("NCHW", "OIHW", "NCHW"))
        return out + b.reshape(1, -1, 1, 1)

    p = params["w1"].shape[-1] // 2
    h = jax.nn.relu(bn(x, params["g1"], params["beta1"], params["m1"], params["v1"]))
    h = conv(h, params["w1"], params["b1"], p)
    h = jax.nn.relu(bn(h, params["g2"], params["beta2"], params["m2"], params["v2"]))
    h = conv(h, params["w2"], params["b2"], p)
    skip = conv(x, params["wr"], params["br"], 0)
    return h + skip


# ----------------------------------- main -----------------------------------

if __name__ == "__main__":
    B, Cin, Cout, H, W, k = 2, 4, 8, 16, 16, 3   # downsample=False, in != out -> conv1x1 skip

    key = jax.random.PRNGKey(0)
    kx, kp = jax.random.split(key)
    x = jax.random.normal(kx, (B, Cin, H, W), jnp.float32)   # NCHW, like the PyTorch module
    params = init_params(kp, Cin, Cout, k)

    out = jax.jit(residual_block_forward)(x, params)
    out = jax.block_until_ready(out)

    ref = reference_forward(x, params)
    assert out.shape == (B, Cout, H, W), out.shape
    assert bool(jnp.all(jnp.isfinite(out)))
    np.testing.assert_allclose(np.asarray(out), np.asarray(ref), rtol=5e-2, atol=5e-2)

    print("KERNEL_OK")
</pallas_src>

<mosaic_0001>
module attributes {stable_mosaic.version = 11 : i64} {
  func.func @_residual_block_kernel(%arg0: i32, %arg1: memref<1x9x460xf32, #tpu.memory_space<vmem>>, %arg2: memref<8x152xbf16, #tpu.memory_space<vmem>>, %arg3: memref<8x5xf32, #tpu.memory_space<vmem>>, %arg4: memref<1x8x384xf32, #tpu.memory_space<vmem>>, %arg5: memref<72x422xf32, #tpu.memory_space<vmem>>, %arg6: memref<80x384xf32, #tpu.memory_space<vmem>>) attributes {dimension_semantics = [#tpu.dimension_semantics<parallel>], iteration_bounds = array<i64: 2>, scalar_prefetch = 0 : i64, scratch_operands = 2 : i64, tpu.core_type = #tpu.core_type<tc>, window_params = [{transform_indices = @transform_0, window_bounds = array<i64: 1, 9, 460>}, {pipeline_mode = #tpu.pipeline_mode<synchronous>, transform_indices = @transform_1, window_bounds = array<i64: 8, 152>}, {pipeline_mode = #tpu.pipeline_mode<synchronous>, transform_indices = @transform_2, window_bounds = array<i64: 8, 5>}, {transform_indices = @transform_3, window_bounds = array<i64: 1, 8, 384>}]} {
    %c0 = arith.constant 0 : index
    %c0_0 = arith.constant 0 : index
    %c0_1 = arith.constant 0 : index
    %0 = vector.load %arg1[%c0, %c0_0, %c0_1] : memref<1x9x460xf32, #tpu.memory_space<vmem>>, vector<1x8x460xf32>
    %1 = vector.shape_cast %0 : vector<1x8x460xf32> to vector<8x460xf32>
    %c0_2 = arith.constant 0 : index
    %c8 = arith.constant 8 : index
    %c0_3 = arith.constant 0 : index
    %2 = vector.load %arg1[%c0_2, %c8, %c0_3] : memref<1x9x460xf32, #tpu.memory_space<vmem>>, vector<1x1x460xf32>
    %3 = vector.shape_cast %2 : vector<1x1x460xf32> to vector<1x460xf32>
    %c0_4 = arith.constant 0 : index
    %c0_5 = arith.constant 0 : index
    %4 = vector.load %arg3[%c0_4, %c0_5] : memref<8x5xf32, #tpu.memory_space<vmem>>, vector<8x1xf32>
    %c0_6 = arith.constant 0 : index
    %c1 = arith.constant 1 : index
    %5 = vector.load %arg3[%c0_6, %c1] : memref<8x5xf32, #tpu.memory_space<vmem>>, vector<8x1xf32>
    %c0_7 = arith.constant 0 : index
    %c2 = arith.constant 2 : index
    %6 = vector.load %arg3[%c0_7, %c2] : memref<8x5xf32, #tpu.memory_space<vmem>>, vector<8x1xf32>
    %c0_8 = arith.constant 0 : index
    %c3 = arith.constant 3 : index
    %7 = vector.load %arg3[%c0_8, %c3] : memref<8x5xf32, #tpu.memory_space<vmem>>, vector<8x1xf32>
    %c0_9 = arith.constant 0 : index
    %c4 = arith.constant 4 : index
    %8 = vector.load %arg3[%c0_9, %c4] : memref<8x5xf32, #tpu.memory_space<vmem>>, vector<8x1xf32>
    %9 = vector.broadcast %4 : vector<8x1xf32> to vector<8x460xf32>
    %10 = arith.mulf %1, %9 : vector<8x460xf32>
    %11 = vector.broadcast %5 : vector<8x1xf32> to vector<8x460xf32>
    %12 = arith.addf %10, %11 : vector<8x460xf32>
    %cst = arith.constant 0.000000e+00 : f32
    %13 = vector.broadcast %cst : f32 to vector<8x460xf32>
    %14 = arith.maximumf %12, %13 : vector<8x460xf32>
    %15 = vector.broadcast %3 : vector<1x460xf32> to vector<8x460xf32>
    %16 = arith.mulf %14, %15 : vector<8x460xf32>
    %17 = vector.extract_strided_slice %16 {offsets = [0, 0], sizes = [8, 422], strides = [1, 1]} : vector<8x460xf32> to vector<8x422xf32>
    %c0_10 = arith.constant 0 : index
    %c0_11 = arith.constant 0 : index
    %18 = vector.load %arg5[%c0_10, %c0_11] : memref<72x422xf32, #tpu.memory_space<vmem>>, vector<8x422xf32>
    tpu.vector_store %arg5[%c0_10, %c0_11], %17 {strides = array<i32>} : memref<72x422xf32, #tpu.memory_space<vmem>>, vector<8x422xf32>,
    %19 = vector.extract_strided_slice %16 {offsets = [0, 1], sizes = [8, 422], strides = [1, 1]} : vector<8x460xf32> to vector<8x422xf32>
    %c8_12 = arith.constant 8 : index
    %c0_13 = arith.constant 0 : index
    %20 = vector.load %arg5[%c8_12, %c0_13] : memref<72x422xf32, #tpu.memory_space<vmem>>, vector<8x422xf32>
    tpu.vector_store %arg5[%c8_12, %c0_13], %19 {strides = array<i32>} : memref<72x422xf32, #tpu.memory_space<vmem>>, vector<8x422xf32>,
    %21 = vector.extract_strided_slice %16 {offsets = [0, 2], sizes = [8, 422], strides = [1, 1]} : vector<8x460xf32> to vector<8x422xf32>
    %c16 = arith.constant 16 : index
    %c0_14 = arith.constant 0 : index
    %22 = vector.load %arg5[%c16, %c0_14] : memref<72x422xf32, #tpu.memory_space<vmem>>, vector<8x422xf32>
    tpu.vector_store %arg5[%c16, %c0_14], %21 {strides = array<i32>} : memref<72x422xf32, #tpu.memory_space<vmem>>, vector<8x422xf32>,
    %23 = vector.extract_strided_slice %16 {offsets = [0, 18], sizes = [8, 422], strides = [1, 1]} : vector<8x460xf32> to vector<8x422xf32>
    %c24 = arith.constant 24 : index
    %c0_15 = arith.constant 0 : index
    %24 = vector.load %arg5[%c24, %c0_15] : memref<72x422xf32, #tpu.memory_space<vmem>>, vector<8x422xf32>
    tpu.vector_store %arg5[%c24, %c0_15], %23 {strides = array<i32>} : memref<72x422xf32, #tpu.memory_space<vmem>>, vector<8x422xf32>,
    %25 = vector.extract_strided_slice %16 {offsets = [0, 19], sizes = [8, 422], strides = [1, 1]} : vector<8x460xf32> to vector<8x422xf32>
    %c32 = arith.constant 32 : index
    %c0_16 = arith.constant 0 : index
    %26 = vector.load %arg5[%c32, %c0_16] : memref<72x422xf32, #tpu.memory_space<vmem>>, vector<8x422xf32>
    tpu.vector_store %arg5[%c32, %c0_16], %25 {strides = array<i32>} : memref<72x422xf32, #tpu.memory_space<vmem>>, vector<8x422xf32>,
    %27 = vector.extract_strided_slice %16 {offsets = [0, 20], sizes = [8, 422], strides = [1, 1]} : vector<8x460xf32> to vector<8x422xf32>
    %c40 = arith.constant 40 : index
    %c0_17 = arith.constant 0 : index
    %28 = vector.load %arg5[%c40, %c0_17] : memref<72x422xf32, #tpu.memory_space<vmem>>, vector<8x422xf32>
    tpu.vector_store %arg5[%c40, %c0_17], %27 {strides = array<i32>} : memref<72x422xf32, #tpu.memory_space<vmem>>, vector<8x422xf32>,
    %29 = vector.extract_strided_slice %16 {offsets = [0, 36], sizes = [8, 422], strides = [1, 1]} : vector<8x460xf32> to vector<8x422xf32>
    %c48 = arith.constant 48 : index
    %c0_18 = arith.constant 0 : index
    %30 = vector.load %arg5[%c48, %c0_18] : memref<72x422xf32, #tpu.memory_space<vmem>>, vector<8x422xf32>
    tpu.vector_store %arg5[%c48, %c0_18], %29 {strides = array<i32>} : memref<72x422xf32, #tpu.memory_space<vmem>>, vector<8x422xf32>,
    %31 = vector.extract_strided_slice %16 {offsets = [0, 37], sizes = [8, 422], strides = [1, 1]} : vector<8x460xf32> to vector<8x422xf32>
    %c56 = arith.constant 56 : index
    %c0_19 = arith.constant 0 : index
    %32 = vector.load %arg5[%c56, %c0_19] : memref<72x422xf32, #tpu.memory_space<vmem>>, vector<8x422xf32>
    tpu.vector_store %arg5[%c56, %c0_19], %31 {strides = array<i32>} : memref<72x422xf32, #tpu.memory_space<vmem>>, vector<8x422xf32>,
    %33 = vector.extract_strided_slice %16 {offsets = [0, 38], sizes = [8, 422], strides = [1, 1]} : vector<8x460xf32> to vector<8x422xf32>
    %c64 = arith.constant 64 : index
    %c0_20 = arith.constant 0 : index
    %34 = vector.load %arg5[%c64, %c0_20] : memref<72x422xf32, #tpu.memory_space<vmem>>, vector<8x422xf32>
    tpu.vector_store %arg5[%c64, %c0_20], %33 {strides = array<i32>} : memref<72x422xf32, #tpu.memory_space<vmem>>, vector<8x422xf32>,
    %c0_21 = arith.constant 0 : index
    %c0_22 = arith.constant 0 : index
    %35 = vector.load %arg2[%c0_21, %c0_22] : memref<8x152xbf16, #tpu.memory_space<vmem>>, vector<8x72xbf16>
    %c0_23 = arith.constant 0 : index
    %c0_24 = arith.constant 0 : index
    %36 = vector.load %arg5[%c0_23, %c0_24] : memref<72x422xf32, #tpu.memory_space<vmem>>, vector<72x422xf32>
    %37 = arith.truncf %36 : vector<72x422xf32> to vector<72x422xbf16>
    %cst_25 = arith.constant dense<0.000000e+00> : vector<8x422xf32>
    %38 = tpu.matmul %35, %37, %cst_25 {dimension_numbers = #tpu.dot_dimension_numbers<[1], [0], [0], [1], [0, 0, 1, 1], [], []>} : vector<8x72xbf16>, vector<72x422xbf16>, vector<8x422xf32> -> vector<8x422xf32>
    %c0_26 = arith.constant 0 : index
    %c8_27 = arith.constant 8 : index
    %c19 = arith.constant 19 : index
    %39 = vector.load %arg1[%c0_26, %c8_27, %c19] : memref<1x9x460xf32, #tpu.memory_space<vmem>>, vector<1x1x422xf32>
    %40 = vector.shape_cast %39 : vector<1x1x422xf32> to vector<1x422xf32>
    %41 = vector.broadcast %6 : vector<8x1xf32> to vector<8x422xf32>
    %42 = arith.mulf %38, %41 : vector<8x422xf32>
    %43 = vector.broadcast %7 : vector<8x1xf32> to vector<8x422xf32>
    %44 = arith.addf %42, %43 : vector<8x422xf32>
    %cst_28 = arith.constant 0.000000e+00 : f32
    %45 = vector.broadcast %cst_28 : f32 to vector<8x422xf32>
    %46 = arith.maximumf %44, %45 : vector<8x422xf32>
    %47 = vector.broadcast %40 : vector<1x422xf32> to vector<8x422xf32>
    %48 = arith.mulf %46, %47 : vector<8x422xf32>
    %49 = vector.extract_strided_slice %48 {offsets = [0, 0], sizes = [8, 384], strides = [1, 1]} : vector<8x422xf32> to vector<8x384xf32>
    %c0_29 = arith.constant 0 : index
    %c0_30 = arith.constant 0 : index
    %50 = vector.load %arg6[%c0_29, %c0_30] : memref<80x384xf32, #tpu.memory_space<vmem>>, vector<8x384xf32>
    tpu.vector_store %arg6[%c0_29, %c0_30], %49 {strides = array<i32>} : memref<80x384xf32, #tpu.memory_space<vmem>>, vector<8x384xf32>,
    %51 = vector.extract_strided_slice %48 {offsets = [0, 1], sizes = [8, 384], strides = [1, 1]} : vector<8x422xf32> to vector<8x384xf32>
    %c8_31 = arith.constant 8 : index
    %c0_32 = arith.constant 0 : index
    %52 = vector.load %arg6[%c8_31, %c0_32] : memref<80x384xf32, #tpu.memory_space<vmem>>, vector<8x384xf32>
    tpu.vector_store %arg6[%c8_31, %c0_32], %51 {strides = array<i32>} : memref<80x384xf32, #tpu.memory_space<vmem>>, vector<8x384xf32>,
    %53 = vector.extract_strided_slice %48 {offsets = [0, 2], sizes = [8, 384], strides = [1, 1]} : vector<8x422xf32> to vector<8x384xf32>
    %c16_33 = arith.constant 16 : index
    %c0_34 = arith.constant 0 : index
    %54 = vector.load %arg6[%c16_33, %c0_34] : memref<80x384xf32, #tpu.memory_space<vmem>>, vector<8x384xf32>
    tpu.vector_store %arg6[%c16_33, %c0_34], %53 {strides = array<i32>} : memref<80x384xf32, #tpu.memory_space<vmem>>, vector<8x384xf32>,
    %55 = vector.extract_strided_slice %48 {offsets = [0, 18], sizes = [8, 384], strides = [1, 1]} : vector<8x422xf32> to vector<8x384xf32>
    %c24_35 = arith.constant 24 : index
    %c0_36 = arith.constant 0 : index
    %56 = vector.load %arg6[%c24_35, %c0_36] : memref<80x384xf32, #tpu.memory_space<vmem>>, vector<8x384xf32>
    tpu.vector_store %arg6[%c24_35, %c0_36], %55 {strides = array<i32>} : memref<80x384xf32, #tpu.memory_space<vmem>>, vector<8x384xf32>,
    %57 = vector.extract_strided_slice %48 {offsets = [0, 19], sizes = [8, 384], strides = [1, 1]} : vector<8x422xf32> to vector<8x384xf32>
    %c32_37 = arith.constant 32 : index
    %c0_38 = arith.constant 0 : index
    %58 = vector.load %arg6[%c32_37, %c0_38] : memref<80x384xf32, #tpu.memory_space<vmem>>, vector<8x384xf32>
    tpu.vector_store %arg6[%c32_37, %c0_38], %57 {strides = array<i32>} : memref<80x384xf32, #tpu.memory_space<vmem>>, vector<8x384xf32>,
    %59 = vector.extract_strided_slice %48 {offsets = [0, 20], sizes = [8, 384], strides = [1, 1]} : vector<8x422xf32> to vector<8x384xf32>
    %c40_39 = arith.constant 40 : index
    %c0_40 = arith.constant 0 : index
    %60 = vector.load %arg6[%c40_39, %c0_40] : memref<80x384xf32, #tpu.memory_space<vmem>>, vector<8x384xf32>
    tpu.vector_store %arg6[%c40_39, %c0_40], %59 {strides = array<i32>} : memref<80x384xf32, #tpu.memory_space<vmem>>, vector<8x384xf32>,
    %61 = vector.extract_strided_slice %48 {offsets = [0, 36], sizes = [8, 384], strides = [1, 1]} : vector<8x422xf32> to vector<8x384xf32>
    %c48_41 = arith.constant 48 : index
    %c0_42 = arith.constant 0 : index
    %62 = vector.load %arg6[%c48_41, %c0_42] : memref<80x384xf32, #tpu.memory_space<vmem>>, vector<8x384xf32>
    tpu.vector_store %arg6[%c48_41, %c0_42], %61 {strides = array<i32>} : memref<80x384xf32, #tpu.memory_space<vmem>>, vector<8x384xf32>,
    %63 = vector.extract_strided_slice %48 {offsets = [0, 37], sizes = [8, 384], strides = [1, 1]} : vector<8x422xf32> to vector<8x384xf32>
    %c56_43 = arith.constant 56 : index
    %c0_44 = arith.constant 0 : index
    %64 = vector.load %arg6[%c56_43, %c0_44] : memref<80x384xf32, #tpu.memory_space<vmem>>, vector<8x384xf32>
    tpu.vector_store %arg6[%c56_43, %c0_44], %63 {strides = array<i32>} : memref<80x384xf32, #tpu.memory_space<vmem>>, vector<8x384xf32>,
    %65 = vector.extract_strided_slice %48 {offsets = [0, 38], sizes = [8, 384], strides = [1, 1]} : vector<8x422xf32> to vector<8x384xf32>
    %c64_45 = arith.constant 64 : index
    %c0_46 = arith.constant 0 : index
    %66 = vector.load %arg6[%c64_45, %c0_46] : memref<80x384xf32, #tpu.memory_space<vmem>>, vector<8x384xf32>
    tpu.vector_store %arg6[%c64_45, %c0_46], %65 {strides = array<i32>} : memref<80x384xf32, #tpu.memory_space<vmem>>, vector<8x384xf32>,
    %c0_47 = arith.constant 0 : index
    %c0_48 = arith.constant 0 : index
    %c38 = arith.constant 38 : index
    %67 = vector.load %arg1[%c0_47, %c0_48, %c38] : memref<1x9x460xf32, #tpu.memory_space<vmem>>, vector<1x8x384xf32>
    %68 = vector.shape_cast %67 : vector<1x8x384xf32> to vector<8x384xf32>
    %c72 = arith.constant 72 : index
    %c0_49 = arith.constant 0 : index
    %69 = vector.load %arg6[%c72, %c0_49] : memref<80x384xf32, #tpu.memory_space<vmem>>, vector<8x384xf32>
    tpu.vector_store %arg6[%c72, %c0_49], %68 {strides = array<i32>} : memref<80x384xf32, #tpu.memory_space<vmem>>, vector<8x384xf32>,
    %c0_50 = arith.constant 0 : index
    %c72_51 = arith.constant 72 : index
    %70 = vector.load %arg2[%c0_50, %c72_51] : memref<8x152xbf16, #tpu.memory_space<vmem>>, vector<8x80xbf16>
    %c0_52 = arith.constant 0 : index
    %c0_53 = arith.constant 0 : index
    %71 = vector.load %arg6[%c0_52, %c0_53] : memref<80x384xf32, #tpu.memory_space<vmem>>, vector<80x384xf32>
    %72 = arith.truncf %71 : vector<80x384xf32> to vector<80x384xbf16>
    %cst_54 = arith.constant dense<0.000000e+00> : vector<8x384xf32>
    %73 = tpu.matmul %70, %72, %cst_54 {dimension_numbers = #tpu.dot_dimension_numbers<[1], [0], [0], [1], [0, 0, 1, 1], [], []>} : vector<8x80xbf16>, vector<80x384xbf16>, vector<8x384xf32> -> vector<8x384xf32>
    %74 = vector.broadcast %8 : vector<8x1xf32> to vector<8x384xf32>
    %75 = arith.addf %73, %74 : vector<8x384xf32>
    %c0_55 = arith.constant 0 : index
    %c0_56 = arith.constant 0 : index
    %c0_57 = arith.constant 0 : index
    %76 = vector.load %arg4[%c0_55, %c0_56, %c0_57] : memref<1x8x384xf32, #tpu.memory_space<vmem>>, vector<1x8x384xf32>
    %77 = vector.shape_cast %76 : vector<1x8x384xf32> to vector<8x384xf32>
    %78 = vector.shape_cast %75 : vector<8x384xf32> to vector<1x8x384xf32>
    tpu.vector_store %arg4[%c0_55, %c0_56, %c0_57], %78 {strides = array<i32>} : memref<1x8x384xf32, #tpu.memory_space<vmem>>, vector<1x8x384xf32>,
    return
  }
  func.func @transform_0(%arg0: i32) -> (i32, i32, i32) {
    %c0_i32 = arith.constant 0 : i32
    %c0_i32_0 = arith.constant 0 : i32
    %c0_i32_1 = arith.constant 0 : i32
    return %arg0, %c0_i32, %c0_i32_0 : i32, i32, i32
  }
  func.func @transform_1(%arg0: i32) -> (i32, i32) {
    %c0_i32 = arith.constant 0 : i32
    %c0_i32_0 = arith.constant 0 : i32
    %c0_i32_1 = arith.constant 0 : i32
    return %c0_i32, %c0_i32_0 : i32, i32
  }
  func.func @transform_2(%arg0: i32) -> (i32, i32) {
    %c0_i32 = arith.constant 0 : i32
    %c0_i32_0 = arith.constant 0 : i32
    %c0_i32_1 = arith.constant 0 : i32
    return %c0_i32, %c0_i32_0 : i32, i32
  }
  func.func @transform_3(%arg0: i32) -> (i32, i32, i32) {
    %c0_i32 = arith.constant 0 : i32
    %c0_i32_0 = arith.constant 0 : i32
    %c0_i32_1 = arith.constant 0 : i32
    return %arg0, %c0_i32, %c0_i32_0 : i32, i32, i32
  }
}

</mosaic_0001>

<llo_original>
// kernel: residual_block_forward.1
$region0: #{residual_block_forward.1}
  #allocation0 [shape = 'u32[]', space=smem, size = 0x4, offset = 0x4, fixed_abs, tag = 'smem constant byte address 0x4 - core index']
  #allocation1 [shape = 'u32[72,128]{1,0:T(1,128)}', space=vmem, size = 0x9000, scoped, tag = 'internal scratch']
  #allocation2 [shape = 'f32[72,422]{1,0:T(8,128)}', space=vmem, size = 0x24000, scoped, tag = 'scratch operand']
  #allocation3 [shape = 'f32[80,384]{1,0:T(8,128)}', space=vmem, size = 0x1e000, scoped, tag = 'scratch operand']
  %s0 = inlined_call_operand.vmem [shape: f32[2,9,460], index: 0, kind: input, shape index: {}]
  %s1 = inlined_call_operand.vmem [shape: bf16[8,152], index: 1, kind: input, shape index: {}]
  %s2 = inlined_call_operand.vmem [shape: f32[8,5], index: 2, kind: input, shape index: {}]
  %s3 = inlined_call_operand.vmem [shape: f32[2,8,384], index: 3, kind: output, shape index: {}]
  %s4 = sld [smem:[#allocation0]]
  $region45: #{residual_block_forward.1} parent=0
    _
  %s6 = ssub.s32 1, %s4
  %s7 = scalar_select 0, %s6, %s4
  loop: start=0, step=1, limit=4
  $region2: #{residual_block_forward.1} parent=0 // loop_pre_header
    _
  $region3: #{residual_block_forward.1} parent=0 // loop_header
    %s9 = sphi 0, %s13
    %p10 = scmp.ge.s32.totalorder %s9, 4
    %s19 = sphi 0, %s21
    %s22 = sphi 0, %s19
    %s23 = sphi 0, %s22
    %s39 = sphi 0, %s23
    %s43 = sphi 0, %s43
    %s45 = sphi 0, %s43
    %s46 = sphi 0, %s45
    %s60 = sphi 0, %s46
    %s64 = sphi 0, %s64
    %s66 = sphi 0, %s64
    %s67 = sphi 0, %s66
    %s81 = sphi 0, %s67
    %s87 = sphi 0, %s89
    %s90 = sphi 0, %s87
    %s91 = sphi 0, %s90
    %s107 = sphi 0, %s91
  $region4: #{residual_block_forward.1} parent=0 // loop_header_branch
    %12 = sbr.rel (%p10) target = $region8
  $region5: #{residual_block_forward.1} parent=0 // loop_body
    %s14 = ssub.s32 %s9, 1
    %s15 = ssub.s32 %s9, 2
    %s16 = sadd.s32 %s9, 1
    %s17 = ssub.s32 %s9, %s16
    %p18 = scmp.eq.s32.totalorder %s17, 0
    %s20 = sadd.s32 %s19, 1
    %s21 = scalar_select %p18, %s19, %s20
    %p24 = pneg %p18
    %p25 = scmp.eq.s32.totalorder %s9, 1
    %p26 = por %p24, %p25
    %p27 = scmp.ne.s32.totalorder %s19, %s22
    %p28 = scmp.eq.s32.totalorder %s9, 0
    %p29 = por %p27, %p28
    %p30 = scmp.ne.s32.totalorder %s19, %s22
    %p31 = scmp.eq.s32.totalorder %s14, 1
    %p32 = por %p30, %p31
    %p33 = scmp.ne.s32.totalorder %s22, %s23
    %p34 = scmp.eq.s32.totalorder %s14, 0
    %p35 = por %p33, %p34
    %p36 = scmp.ne.s32.totalorder %s22, %s23
    %p37 = scmp.eq.s32.totalorder %s15, 1
    %p38 = por %p36, %p37
    %p40 = scmp.ne.s32.totalorder %s23, %s39
    %p41 = scmp.eq.s32.totalorder %s15, 0
    %p42 = por %p40, %p41
    %s44 = sadd.s32 %s43, 1
    %p47 = scmp.eq.s32.totalorder %s9, 1
    %p48 = scmp.ne.s32.totalorder %s43, %s45
    %p49 = scmp.eq.s32.totalorder %s9, 0
    %p50 = por %p48, %p49
    %p51 = scmp.ne.s32.totalorder %s43, %s45
    %p52 = scmp.eq.s32.totalorder %s14, 1
    %p53 = por %p51, %p52
    %p54 = scmp.ne.s32.totalorder %s45, %s46
    %p55 = scmp.eq.s32.totalorder %s14, 0
    %p56 = por %p54, %p55
    %p57 = scmp.ne.s32.totalorder %s45, %s46
    %p58 = scmp.eq.s32.totalorder %s15, 1
    %p59 = por %p57, %p58
    %p61 = scmp.ne.s32.totalorder %s46, %s60
    %p62 = scmp.eq.s32.totalorder %s15, 0
    %p63 = por %p61, %p62
    %s65 = sadd.s32 %s64, 1
    %p68 = scmp.eq.s32.totalorder %s9, 1
    %p69 = scmp.ne.s32.totalorder %s64, %s66
    %p70 = scmp.eq.s32.totalorder %s9, 0
    %p71 = por %p69, %p70
    %p72 = scmp.ne.s32.totalorder %s64, %s66
    %p73 = scmp.eq.s32.totalorder %s14, 1
    %p74 = por %p72, %p73
    %p75 = scmp.ne.s32.totalorder %s66, %s67
    %p76 = scmp.eq.s32.totalorder %s14, 0
    %p77 = por %p75, %p76
    %p78 = scmp.ne.s32.totalorder %s66, %s67
    %p79 = scmp.eq.s32.totalorder %s15, 1
    %p80 = por %p78, %p79
    %p82 = scmp.ne.s32.totalorder %s67, %s81
    %p83 = scmp.eq.s32.totalorder %s15, 0
    %p84 = por %p82, %p83
    %s85 = ssub.s32 %s9, %s16
    %p86 = scmp.eq.s32.totalorder %s85, 0
    %s88 = sadd.s32 %s87, 1
    %s89 = scalar_select %p86, %s87, %s88
    %p92 = pneg %p86
    %p93 = scmp.eq.s32.totalorder %s9, 1
    %p94 = por %p92, %p93
    %p95 = scmp.ne.s32.totalorder %s87, %s90
    %p96 = scmp.eq.s32.totalorder %s9, 0
    %p97 = por %p95, %p96
    %p98 = scmp.ne.s32.totalorder %s87, %s90
    %p99 = scmp.eq.s32.totalorder %s14, 1
    %p100 = por %p98, %p99
    %p101 = scmp.ne.s32.totalorder %s90, %s91
    %p102 = scmp.eq.s32.totalorder %s14, 0
    %p103 = por %p101, %p102
    %p104 = scmp.ne.s32.totalorder %s90, %s91
    %p105 = scmp.eq.s32.totalorder %s15, 1
    %p106 = por %p104, %p105
    %p108 = scmp.ne.s32.totalorder %s91, %s107
    %p109 = scmp.eq.s32.totalorder %s15, 0
    %p110 = por %p108, %p109
    %p111 = scmp.le.s32.totalorder 1, %s9
    %p112 = scmp.lt.s32.totalorder %s9, 3
    %p113 = pnand %p111, %p112
    %p114 = pneg %p113
    // Predicated region
    $region9: #{residual_block_forward.1} parent=5 // pred_check
      _
    $region10: #{residual_block_forward.1} parent=5 // pred_check_branch
      %116 = sbr.rel (%p113) target = $region12
    $region11: #{residual_block_forward.1} parent=5 // pred_region
      %s117 = ssub.s32 %s9, 1
      // Predicated region
      $region13: #{residual_block_forward.1} parent=11 // pred_check
        %p118 = pneg %p56
      $region14: #{residual_block_forward.1} parent=11 // pred_check_branch
        %120 = sbr.rel (%p118) target = $region16
      $region15: #{residual_block_forward.1} parent=11 // pred_region
        _
      $region16: #{residual_block_forward.1} parent=11 // pred_fallthru
        _
      // Predicated region
      $region17: #{residual_block_forward.1} parent=11 // pred_check
        %p121 = pneg %p77
      $region18: #{residual_block_forward.1} parent=11 // pred_check_branch
        %123 = sbr.rel (%p121) target = $region20
      $region19: #{residual_block_forward.1} parent=11 // pred_region
        _
      $region20: #{residual_block_forward.1} parent=11 // pred_fallthru
        _
    $region12: #{residual_block_forward.1} parent=5 // pred_fallthru
      _
    %p124 = scmp.lt.s32.totalorder %s9, 2
    // Predicated region
    $region21: #{residual_block_forward.1} parent=5 // pred_check
      %p125 = pneg %p124
    $region22: #{residual_block_forward.1} parent=5 // pred_check_branch
      %127 = sbr.rel (%p125) target = $region24
    $region23: #{residual_block_forward.1} parent=5 // pred_region
      // Predicated region
      $region25: #{residual_block_forward.1} parent=23 // pred_check
        %p128 = pneg %p29
      $region26: #{residual_block_forward.1} parent=23 // pred_check_branch
        %130 = sbr.rel (%p128) target = $region28
      $region27: #{residual_block_forward.1} parent=23 // pred_region
        %p131 = scmp.lt.s32.totalorder %s9, 1
        %s132 = scalar_select %p131, %s9, 1
        %s133 = smul.addr %s132, 8
        %s134 = smul.addr %s133, 8
        %s135 = scalar_lea.vmem %s0, %s134
      $region28: #{residual_block_forward.1} parent=23 // pred_fallthru
        _
    $region24: #{residual_block_forward.1} parent=5 // pred_fallthru
      _
    %p136 = scmp.le.s32.totalorder 1, %s9
    %p137 = scmp.lt.s32.totalorder %s9, 3
    %p138 = pnand %p136, %p137
    %p139 = pneg %p138
    // Predicated region
    $region29: #{residual_block_forward.1} parent=5 // pred_check
      _
    $region30: #{residual_block_forward.1} parent=5 // pred_check_branch
      %141 = sbr.rel (%p138) target = $region32
    $region31: #{residual_block_forward.1} parent=5 // pred_region
      %s142 = ssub.s32 %s9, 1
      %p143 = scmp.lt.s32.totalorder %s14, 1
      %s144 = scalar_select %p143, %s14, 1
      %s145 = smul.addr %s144, 8
      %s146 = smul.addr %s145, 8
      %s147 = scalar_lea.vmem %s0, %s146
      %p148 = pneg %p35
      %p149 = pneg %p32
      %p150 = pneg %p56
      %p151 = pneg %p53
      %p152 = pneg %p77
      %p153 = pneg %p74
      %p154 = pneg %p103
      %p155 = pneg %p100
      %p156 = scmp.lt.s32.totalorder %s14, 1
      %s157 = scalar_select %p156, %s14, 1
      %s158 = smul.addr %s157, 3
      %s159 = smul.addr %s158, 8
      %s160 = scalar_lea.vmem %s3, %s159
      %p161 = scmp.lt.s32.totalorder %s14, 1
      %s162 = scalar_select %p161, %s14, 1
      %s163 = smul.addr %s162, 8
      %s164 = smul.addr %s163, 8
      %s165 = scalar_lea.vmem %s0, %s164
      %p166 = scmp.lt.s32.totalorder %s14, 1
      %s167 = scalar_select %p166, %s14, 1
      %s168 = smul.addr %s167, 3
      %s169 = smul.addr %s168, 8
      %s170 = scalar_lea.vmem %s3, %s169
      %v172 = vld [vmem:[%s165] sm:$0xff]
      %v173 = vld [vmem:[%s165 + $0x8] sm:$0xff]
      %v174 = vld [vmem:[%s165 + $0x10] sm:$0xff]
      %v175 = vld [vmem:[%s165 + $0x18] sm:$0xff]
      %s176 = scalar_lea.vmem %s165, 32
      %v177 = vld [vmem:[%s176] ss:$8 sm:$0xf]
      %v178 = vld [vmem:[%s2] sm:$0xff]
      %180 = vset.pattern.permute.xlu0 0
      %181 = vperm.xlu0 %180, %v178
      %v182 = vpop.permute.xlu0 %181
      %v184 = vmul.f32 %v172, %v182
      %v185 = vmul.f32 %v173, %v182
      %v186 = vmul.f32 %v174, %v182
      %v187 = vmul.f32 %v175, %v182
      %188 = vset.pattern.permute.xlu0 1
      %189 = vperm.xlu0 %188, %v178
      %v190 = vpop.permute.xlu0 %189
      %v192 = vadd.f32 %v184, %v190
      %v193 = vadd.f32 %v185, %v190
      %v194 = vadd.f32 %v186, %v190
      %v195 = vadd.f32 %v187, %v190
      %v196 = vmax.f32 %v192, 0.0
      %v197 = vmax.f32 %v193, 0.0
      %v198 = vmax.f32 %v194, 0.0
      %v199 = vmax.f32 %v195, 0.0
      %v201 = vperm.slane %v177, 0
      %v202 = vperm.slane %v177, 1
      %v203 = vperm.slane %v177, 2
      %v204 = vperm.slane %v177, 3
      %v209 = vmul.f32 %v196, %v201
      %v210 = vmul.f32 %v197, %v202
      %v211 = vmul.f32 %v198, %v203
      %v212 = vmul.f32 %v199, %v204
      %213 = vst [vmem:[#allocation2] sm:$0xff] %v209
      %214 = vst [vmem:[#allocation2 + $0x8] sm:$0xff] %v210
      %215 = vst [vmem:[#allocation2 + $0x10] sm:$0xff] %v211
      %vm216 = vcmask 310272
      %217 = vst.msk [vmem:[#allocation2 + $0x18] sm:$0xff] %vm216, %v212
      %222 = vrot.lane.b32.xlu0 %v209, 127
      %v223 = vpop.permute.xlu0 %222
      %224 = vrot.lane.b32.xlu0 %v210, 127
      %v225 = vpop.permute.xlu0 %224
      %226 = vrot.lane.b32.xlu0 %v211, 127
      %v227 = vpop.permute.xlu0 %226
      %228 = vrot.lane.b32.xlu0 %v212, 127
      %v229 = vpop.permute.xlu0 %228
      %vm230 = vcmask 1039360
      %v231 = vsel %vm230, %v223, %v225
      %v232 = vsel %vm230, %v225, %v227
      %v233 = vsel %vm230, %v227, %v229
      %238 = vst [vmem:[#allocation2 + $0x20] sm:$0xff] %v231
      %239 = vst [vmem:[#allocation2 + $0x28] sm:$0xff] %v232
      %240 = vst [vmem:[#allocation2 + $0x30] sm:$0xff] %v233
      %241 = vst.msk [vmem:[#allocation2 + $0x38] sm:$0xff] %vm216, %v229
      %242 = vrot.lane.b32.xlu0 %v209, 126
      %v243 = vpop.permute.xlu0 %242
      %244 = vrot.lane.b32.xlu0 %v210, 126
      %v245 = vpop.permute.xlu0 %244
      %246 = vrot.lane.b32.xlu0 %v211, 126
      %v247 = vpop.permute.xlu0 %246
      %248 = vrot.lane.b32.xlu0 %v212, 126
      %v249 = vpop.permute.xlu0 %248
      %vm250 = vcmask 1031168
      %v251 = vsel %vm250, %v243, %v245
      %v252 = vsel %vm250, %v245, %v247
      %v253 = vsel %vm250, %v247, %v249
      %258 = vst [vmem:[#allocation2 + $0x40] sm:$0xff] %v251
      %259 = vst [vmem:[#allocation2 + $0x48] sm:$0xff] %v252
      %260 = vst [vmem:[#allocation2 + $0x50] sm:$0xff] %v253
      %261 = vst.msk [vmem:[#allocation2 + $0x58] sm:$0xff] %vm216, %v249
      %262 = vrot.lane.b32.xlu0 %v209, 110
      %v263 = vpop.permute.xlu0 %262
      %264 = vrot.lane.b32.xlu0 %v210, 110
      %v265 = vpop.permute.xlu0 %264
      %266 = vrot.lane.b32.xlu0 %v211, 110
      %v267 = vpop.permute.xlu0 %266
      %268 = vrot.lane.b32.xlu0 %v212, 110
      %v269 = vpop.permute.xlu0 %268
      %vm270 = vcmask 900096
      %v271 = vsel %vm270, %v263, %v265
      %v272 = vsel %vm270, %v265, %v267
      %v273 = vsel %vm270, %v267, %v269
      %278 = vst [vmem:[#allocation2 + $0x60] sm:$0xff] %v271
      %279 = vst [vmem:[#allocation2 + $0x68] sm:$0xff] %v272
      %280 = vst [vmem:[#allocation2 + $0x70] sm:$0xff] %v273
      %281 = vst.msk [vmem:[#allocation2 + $0x78] sm:$0xff] %vm216, %v269
      %282 = vrot.lane.b32.xlu0 %v209, 109
      %v283 = vpop.permute.xlu0 %282
      %284 = vrot.lane.b32.xlu0 %v210, 109
      %v285 = vpop.permute.xlu0 %284
      %286 = vrot.lane.b32.xlu0 %v211, 109
      %v287 = vpop.permute.xlu0 %286
      %288 = vrot.lane.b32.xlu0 %v212, 109
      %v289 = vpop.permute.xlu0 %288
      %vm290 = vcmask 891904
      %v291 = vsel %vm290, %v283, %v285
      %v292 = vsel %vm290, %v285, %v287
      %v293 = vsel %vm290, %v287, %v289
      %298 = vst [vmem:[#allocation2 + $0x80] sm:$0xff] %v291
      %299 = vst [vmem:[#allocation2 + $0x88] sm:$0xff] %v292
      %300 = vst [vmem:[#allocation2 + $0x90] sm:$0xff] %v293
      %301 = vst.msk [vmem:[#allocation2 + $0x98] sm:$0xff] %vm216, %v289
      %302 = vrot.lane.b32.xlu0 %v209, 108
      %v303 = vpop.permute.xlu0 %302
      %304 = vrot.lane.b32.xlu0 %v210, 108
      %v305 = vpop.permute.xlu0 %304
      %306 = vrot.lane.b32.xlu0 %v211, 108
      %v307 = vpop.permute.xlu0 %306
      %308 = vrot.lane.b32.xlu0 %v212, 108
      %v309 = vpop.permute.xlu0 %308
      %vm310 = vcmask 883712
      %v311 = vsel %vm310, %v303, %v305
      %v312 = vsel %vm310, %v305, %v307
      %v313 = vsel %vm310, %v307, %v309
      %318 = vst [vmem:[#allocation2 + $0xa0] sm:$0xff] %v311
      %319 = vst [vmem:[#allocation2 + $0xa8] sm:$0xff] %v312
      %320 = vst [vmem:[#allocation2 + $0xb0] sm:$0xff] %v313
      %321 = vst.msk [vmem:[#allocation2 + $0xb8] sm:$0xff] %vm216, %v309
      %322 = vrot.lane.b32.xlu0 %v209, 92
      %v323 = vpop.permute.xlu0 %322
      %324 = vrot.lane.b32.xlu0 %v210, 92
      %v325 = vpop.permute.xlu0 %324
      %326 = vrot.lane.b32.xlu0 %v211, 92
      %v327 = vpop.permute.xlu0 %326
      %328 = vrot.lane.b32.xlu0 %v212, 92
      %v329 = vpop.permute.xlu0 %328
      %vm330 = vcmask 752640
      %v331 = vsel %vm330, %v323, %v325
      %v332 = vsel %vm330, %v325, %v327
      %v333 = vsel %vm330, %v327, %v329
      %338 = vst [vmem:[#allocation2 + $0xc0] sm:$0xff] %v331
      %339 = vst [vmem:[#allocation2 + $0xc8] sm:$0xff] %v332
      %340 = vst [vmem:[#allocation2 + $0xd0] sm:$0xff] %v333
      %341 = vst.msk [vmem:[#allocation2 + $0xd8] sm:$0xff] %vm216, %v329
      %342 = vrot.lane.b32.xlu0 %v209, 91
      %v343 = vpop.permute.xlu0 %342
      %344 = vrot.lane.b32.xlu0 %v210, 91
      %v345 = vpop.permute.xlu0 %344
      %346 = vrot.lane.b32.xlu0 %v211, 91
      %v347 = vpop.permute.xlu0 %346
      %348 = vrot.lane.b32.xlu0 %v212, 91
      %v349 = vpop.permute.xlu0 %348
      %vm350 = vcmask 744448
      %v351 = vsel %vm350, %v343, %v345
      %v352 = vsel %vm350, %v345, %v347
      %v353 = vsel %vm350, %v347, %v349
      %358 = vst [vmem:[#allocation2 + $0xe0] sm:$0xff] %v351
      %359 = vst [vmem:[#allocation2 + $0xe8] sm:$0xff] %v352
      %360 = vst [vmem:[#allocation2 + $0xf0] sm:$0xff] %v353
      %361 = vst.msk [vmem:[#allocation2 + $0xf8] sm:$0xff] %vm216, %v349
      %362 = vrot.lane.b32.xlu0 %v209, 90
      %v363 = vpop.permute.xlu0 %362
      %364 = vrot.lane.b32.xlu0 %v210, 90
      %v365 = vpop.permute.xlu0 %364
      %366 = vrot.lane.b32.xlu0 %v211, 90
      %v367 = vpop.permute.xlu0 %366
      %368 = vrot.lane.b32.xlu0 %v212, 90
      %v369 = vpop.permute.xlu0 %368
      %vm370 = vcmask 736256
      %v371 = vsel %vm370, %v363, %v365
      %v372 = vsel %vm370, %v365, %v367
      %v373 = vsel %vm370, %v367, %v369
      %378 = vst [vmem:[#allocation2 + $0x100] sm:$0xff] %v371
      %379 = vst [vmem:[#allocation2 + $0x108] sm:$0xff] %v372
      %380 = vst [vmem:[#allocation2 + $0x110] sm:$0xff] %v373
      %381 = vst.msk [vmem:[#allocation2 + $0x118] sm:$0xff] %vm216, %v369
      %v382 = vld [vmem:[%s1] sm:$0xf]
      %v383 = vld [vmem:[#allocation2] sm:$0xff]
      %v384 = vld [vmem:[#allocation2 + $0x8] sm:$0xff]
      %v385 = vld [vmem:[#allocation2 + $0x10] sm:$0xff]
      %v386 = vld [vmem:[#allocation2 + $0x18] sm:$0xff]
      %v387 = vld [vmem:[#allocation2 + $0x20] sm:$0xff]
      %v388 = vld [vmem:[#allocation2 + $0x28] sm:$0xff]
      %v389 = vld [vmem:[#allocation2 + $0x30] sm:$0xff]
      %v390 = vld [vmem:[#allocation2 + $0x38] sm:$0xff]
      %v391 = vld [vmem:[#allocation2 + $0x40] sm:$0xff]
      %v392 = vld [vmem:[#allocation2 + $0x48] sm:$0xff]
      %v393 = vld [vmem:[#allocation2 + $0x50] sm:$0xff]
      %v394 = vld [vmem:[#allocation2 + $0x58] sm:$0xff]
      %v395 = vld [vmem:[#allocation2 + $0x60] sm:$0xff]
      %v396 = vld [vmem:[#allocation2 + $0x68] sm:$0xff]
      %v397 = vld [vmem:[#allocation2 + $0x70] sm:$0xff]
      %v398 = vld [vmem:[#allocation2 + $0x78] sm:$0xff]
      %v399 = vld [vmem:[#allocation2 + $0x80] sm:$0xff]
      %v400 = vld [vmem:[#allocation2 + $0x88] sm:$0xff]
      %v401 = vld [vmem:[#allocation2 + $0x90] sm:$0xff]
      %v402 = vld [vmem:[#allocation2 + $0x98] sm:$0xff]
      %v403 = vld [vmem:[#allocation2 + $0xa0] sm:$0xff]
      %v404 = vld [vmem:[#allocation2 + $0xa8] sm:$0xff]
      %v405 = vld [vmem:[#allocation2 + $0xb0] sm:$0xff]
      %v406 = vld [vmem:[#allocation2 + $0xb8] sm:$0xff]
      %v407 = vld [vmem:[#allocation2 + $0xc0] sm:$0xff]
      %v408 = vld [vmem:[#allocation2 + $0xc8] sm:$0xff]
      %v409 = vld [vmem:[#allocation2 + $0xd0] sm:$0xff]
      %v410 = vld [vmem:[#allocation2 + $0xd8] sm:$0xff]
      %v411 = vld [vmem:[#allocation2 + $0xe0] sm:$0xff]
      %v412 = vld [vmem:[#allocation2 + $0xe8] sm:$0xff]
      %v413 = vld [vmem:[#allocation2 + $0xf0] sm:$0xff]
      %v414 = vld [vmem:[#allocation2 + $0xf8] sm:$0xff]
      %v415 = vld [vmem:[#allocation2 + $0x100] sm:$0xff]
      %v416 = vld [vmem:[#allocation2 + $0x108] sm:$0xff]
      %v417 = vld [vmem:[#allocation2 + $0x110] sm:$0xff]
      %v418 = vld [vmem:[#allocation2 + $0x118] sm:$0xff]
      %v419 = vpack.c.bf16 %v387, %v383
      %v420 = vpack.c.bf16 %v388, %v384
      %v421 = vpack.c.bf16 %v389, %v385
      %v422 = vpack.c.bf16 %v390, %v386
      %v423 = vpack.c.bf16 %v395, %v391
      %v424 = vpack.c.bf16 %v396, %v392
      %v425 = vpack.c.bf16 %v397, %v393
      %v426 = vpack.c.bf16 %v398, %v394
      %v427 = vpack.c.bf16 %v403, %v399
      %v428 = vpack.c.bf16 %v404, %v400
      %v429 = vpack.c.bf16 %v405, %v401
      %v430 = vpack.c.bf16 %v406, %v402
      %v431 = vpack.c.bf16 %v411, %v407
      %v432 = vpack.c.bf16 %v412, %v408
      %v433 = vpack.c.bf16 %v413, %v409
      %v434 = vpack.c.bf16 %v414, %v410
      %v435 = vpack.c.bf16 %v415, %v415
      %v436 = vpack.c.bf16 %v416, %v416
      %v437 = vpack.c.bf16 %v417, %v417
      %v438 = vpack.c.bf16 %v418, %v418
      %vm439 = vcmask 588800
      %v441 = vsel %vm439, %v382, 0
      %vm443 = vcmask 1043456
      %v445 = vsel %vm443, %v435, 0
      %v448 = vsel %vm443, %v436, 0
      %v451 = vsel %vm443, %v437, 0
      %v454 = vsel %vm443, %v438, 0
      %456 = vmatpush.bf16.msra.mxu0 0
      %457 = vmatpush.bf16.msra.mxu0 0
      %458 = vmatpush.bf16.msra.mxu0 0
      %459 = vmatpush.bf16.msra.mxu0 %v445
      %460 = vmatpush.bf16.msra.mxu0 %v431
      %461 = vmatpush.bf16.msra.mxu0 %v427
      %462 = vmatpush.bf16.msra.mxu0 %v423
      %463 = vmatpush.bf16.msra.mxu0 %v419
      %464 = vmatmul.bf16.gmra.mxu0 %v441
      %v465 = vpop.f32.mrf.mxu0
      %v466 = vadd.f32 0.0, %v465
      %v467 = vpop.f32.mrf.mxu0
      %468 = vdwg.mxu0
      %469 = vmatpush.bf16.msra.mxu0 0
      %470 = vmatpush.bf16.msra.mxu0 0
      %471 = vmatpush.bf16.msra.mxu0 0
      %472 = vmatpush.bf16.msra.mxu0 %v448
      %473 = vmatpush.bf16.msra.mxu0 %v432
      %474 = vmatpush.bf16.msra.mxu0 %v428
      %475 = vmatpush.bf16.msra.mxu0 %v424
      %476 = vmatpush.bf16.msra.mxu0 %v420
      %477 = vmatmul.bf16.gmra.mxu0 %v441
      %v478 = vpop.f32.mrf.mxu0
      %v479 = vadd.f32 0.0, %v478
      %v480 = vpop.f32.mrf.mxu0
      %481 = vdwg.mxu0
      %482 = vmatpush.bf16.msra.mxu0 0
      %483 = vmatpush.bf16.msra.mxu0 0
      %484 = vmatpush.bf16.msra.mxu0 0
      %485 = vmatpush.bf16.msra.mxu0 %v451
      %486 = vmatpush.bf16.msra.mxu0 %v433
      %487 = vmatpush.bf16.msra.mxu0 %v429
      %488 = vmatpush.bf16.msra.mxu0 %v425
      %489 = vmatpush.bf16.msra.mxu0 %v421
      %490 = vmatmul.bf16.gmra.mxu0 %v441
      %v491 = vpop.f32.mrf.mxu0
      %v492 = vadd.f32 0.0, %v491
      %v493 = vpop.f32.mrf.mxu0
      %494 = vdwg.mxu0
      %495 = vmatpush.bf16.msra.mxu0 0
      %496 = vmatpush.bf16.msra.mxu0 0
      %497 = vmatpush.bf16.msra.mxu0 0
      %498 = vmatpush.bf16.msra.mxu0 %v454
      %499 = vmatpush.bf16.msra.mxu0 %v434
      %500 = vmatpush.bf16.msra.mxu0 %v430
      %501 = vmatpush.bf16.msra.mxu0 %v426
      %502 = vmatpush.bf16.msra.mxu0 %v422
      %503 = vmatmul.bf16.gmra.mxu0 %v441
      %v504 = vpop.f32.mrf.mxu0
      %v505 = vadd.f32 0.0, %v504
      %v506 = vpop.f32.mrf.mxu0
      %507 = vdwg.mxu0
      %v508 = vld [vmem:[%s176] ss:$8 sm:$0xf]
      %509 = vset.pattern.permute.xlu0 2
      %510 = vperm.xlu0 %509, %v178
      %v511 = vpop.permute.xlu0 %510
      %v513 = vmul.f32 %v466, %v511
      %v514 = vmul.f32 %v479, %v511
      %v515 = vmul.f32 %v492, %v511
      %v516 = vmul.f32 %v505, %v511
      %517 = vset.pattern.permute.xlu0 3
      %518 = vperm.xlu0 %517, %v178
      %v519 = vpop.permute.xlu0 %518
      %v521 = vadd.f32 %v513, %v519
      %v522 = vadd.f32 %v514, %v519
      %v523 = vadd.f32 %v515, %v519
      %v524 = vadd.f32 %v516, %v519
      %v525 = vmax.f32 %v521, 0.0
      %v526 = vmax.f32 %v522, 0.0
      %v527 = vmax.f32 %v523, 0.0
      %v528 = vmax.f32 %v524, 0.0
      %v530 = vperm.slane %v508, 0
      %v531 = vperm.slane %v508, 1
      %v532 = vperm.slane %v508, 2
      %v533 = vperm.slane %v508, 3
      %534 = vrot.lane.b32.xlu0 %v530, 109
      %v535 = vpop.permute.xlu0 %534
      %536 = vrot.lane.b32.xlu0 %v531, 109
      %v537 = vpop.permute.xlu0 %536
      %538 = vrot.lane.b32.xlu0 %v532, 109
      %v539 = vpop.permute.xlu0 %538
      %540 = vrot.lane.b32.xlu0 %v533, 109
      %v541 = vpop.permute.xlu0 %540
      %v542 = vsel %vm290, %v535, %v537
      %v543 = vsel %vm290, %v537, %v539
      %v544 = vsel %vm290, %v539, %v541
      %v549 = vmul.f32 %v525, %v542
      %v550 = vmul.f32 %v526, %v543
      %v551 = vmul.f32 %v527, %v544
      %v552 = vmul.f32 %v528, %v541
      %553 = vst [vmem:[#allocation3] sm:$0xff] %v549
      %554 = vst [vmem:[#allocation3 + $0x8] sm:$0xff] %v550
      %555 = vst [vmem:[#allocation3 + $0x10] sm:$0xff] %v551
      %560 = vrot.lane.b32.xlu0 %v549, 127
      %v561 = vpop.permute.xlu0 %560
      %562 = vrot.lane.b32.xlu0 %v550, 127
      %v563 = vpop.permute.xlu0 %562
      %564 = vrot.lane.b32.xlu0 %v551, 127
      %v565 = vpop.permute.xlu0 %564
      %566 = vrot.lane.b32.xlu0 %v552, 127
      %v567 = vpop.permute.xlu0 %566
      %v568 = vsel %vm230, %v561, %v563
      %v569 = vsel %vm230, %v563, %v565
      %v570 = vsel %vm230, %v565, %v567
      %574 = vst [vmem:[#allocation3 + $0x18] sm:$0xff] %v568
      %575 = vst [vmem:[#allocation3 + $0x20] sm:$0xff] %v569
      %576 = vst [vmem:[#allocation3 + $0x28] sm:$0xff] %v570
      %577 = vrot.lane.b32.xlu0 %v549, 126
      %v578 = vpop.permute.xlu0 %577
      %579 = vrot.lane.b32.xlu0 %v550, 126
      %v580 = vpop.permute.xlu0 %579
      %581 = vrot.lane.b32.xlu0 %v551, 126
      %v582 = vpop.permute.xlu0 %581
      %583 = vrot.lane.b32.xlu0 %v552, 126
      %v584 = vpop.permute.xlu0 %583
      %v585 = vsel %vm250, %v578, %v580
      %v586 = vsel %vm250, %v580, %v582
      %v587 = vsel %vm250, %v582, %v584
      %591 = vst [vmem:[#allocation3 + $0x30] sm:$0xff] %v585
      %592 = vst [vmem:[#allocation3 + $0x38] sm:$0xff] %v586
      %593 = vst [vmem:[#allocation3 + $0x40] sm:$0xff] %v587
      %594 = vrot.lane.b32.xlu0 %v549, 110
      %v595 = vpop.permute.xlu0 %594
      %596 = vrot.lane.b32.xlu0 %v550, 110
      %v597 = vpop.permute.xlu0 %596
      %598 = vrot.lane.b32.xlu0 %v551, 110
      %v599 = vpop.permute.xlu0 %598
      %600 = vrot.lane.b32.xlu0 %v552, 110
      %v601 = vpop.permute.xlu0 %600
      %v602 = vsel %vm270, %v595, %v597
      %v603 = vsel %vm270, %v597, %v599
      %v604 = vsel %vm270, %v599, %v601
      %608 = vst [vmem:[#allocation3 + $0x48] sm:$0xff] %v602
      %609 = vst [vmem:[#allocation3 + $0x50] sm:$0xff] %v603
      %610 = vst [vmem:[#allocation3 + $0x58] sm:$0xff] %v604
      %611 = vrot.lane.b32.xlu0 %v549, 109
      %v612 = vpop.permute.xlu0 %611
      %613 = vrot.lane.b32.xlu0 %v550, 109
      %v614 = vpop.permute.xlu0 %613
      %615 = vrot.lane.b32.xlu0 %v551, 109
      %v616 = vpop.permute.xlu0 %615
      %617 = vrot.lane.b32.xlu0 %v552, 109
      %v618 = vpop.permute.xlu0 %617
      %v619 = vsel %vm290, %v612, %v614
      %v620 = vsel %vm290, %v614, %v616
      %v621 = vsel %vm290, %v616, %v618
      %625 = vst [vmem:[#allocation3 + $0x60] sm:$0xff] %v619
      %626 = vst [vmem:[#allocation3 + $0x68] sm:$0xff] %v620
      %627 = vst [vmem:[#allocation3 + $0x70] sm:$0xff] %v621
      %628 = vrot.lane.b32.xlu0 %v549, 108
      %v629 = vpop.permute.xlu0 %628
      %630 = vrot.lane.b32.xlu0 %v550, 108
      %v631 = vpop.permute.xlu0 %630
      %632 = vrot.lane.b32.xlu0 %v551, 108
      %v633 = vpop.permute.xlu0 %632
      %634 = vrot.lane.b32.xlu0 %v552, 108
      %v635 = vpop.permute.xlu0 %634
      %v636 = vsel %vm310, %v629, %v631
      %v637 = vsel %vm310, %v631, %v633
      %v638 = vsel %vm310, %v633, %v635
      %642 = vst [vmem:[#allocation3 + $0x78] sm:$0xff] %v636
      %643 = vst [vmem:[#allocation3 + $0x80] sm:$0xff] %v637
      %644 = vst [vmem:[#allocation3 + $0x88] sm:$0xff] %v638
      %645 = vrot.lane.b32.xlu0 %v549, 92
      %v646 = vpop.permute.xlu0 %645
      %647 = vrot.lane.b32.xlu0 %v550, 92
      %v648 = vpop.permute.xlu0 %647
      %649 = vrot.lane.b32.xlu0 %v551, 92
      %v650 = vpop.permute.xlu0 %649
      %651 = vrot.lane.b32.xlu0 %v552, 92
      %v652 = vpop.permute.xlu0 %651
      %v653 = vsel %vm330, %v646, %v648
      %v654 = vsel %vm330, %v648, %v650
      %v655 = vsel %vm330, %v650, %v652
      %659 = vst [vmem:[#allocation3 + $0x90] sm:$0xff] %v653
      %660 = vst [vmem:[#allocation3 + $0x98] sm:$0xff] %v654
      %661 = vst [vmem:[#allocation3 + $0xa0] sm:$0xff] %v655
      %662 = vrot.lane.b32.xlu0 %v549, 91
      %v663 = vpop.permute.xlu0 %662
      %664 = vrot.lane.b32.xlu0 %v550, 91
      %v665 = vpop.permute.xlu0 %664
      %666 = vrot.lane.b32.xlu0 %v551, 91
      %v667 = vpop.permute.xlu0 %666
      %668 = vrot.lane.b32.xlu0 %v552, 91
      %v669 = vpop.permute.xlu0 %668
      %v670 = vsel %vm350, %v663, %v665
      %v671 = vsel %vm350, %v665, %v667
      %v672 = vsel %vm350, %v667, %v669
      %676 = vst [vmem:[#allocation3 + $0xa8] sm:$0xff] %v670
      %677 = vst [vmem:[#allocation3 + $0xb0] sm:$0xff] %v671
      %678 = vst [vmem:[#allocation3 + $0xb8] sm:$0xff] %v672
      %679 = vrot.lane.b32.xlu0 %v549, 90
      %v680 = vpop.permute.xlu0 %679
      %681 = vrot.lane.b32.xlu0 %v550, 90
      %v682 = vpop.permute.xlu0 %681
      %683 = vrot.lane.b32.xlu0 %v551, 90
      %v684 = vpop.permute.xlu0 %683
      %685 = vrot.lane.b32.xlu0 %v552, 90
      %v686 = vpop.permute.xlu0 %685
      %v687 = vsel %vm370, %v680, %v682
      %v688 = vsel %vm370, %v682, %v684
      %v689 = vsel %vm370, %v684, %v686
      %693 = vst [vmem:[#allocation3 + $0xc0] sm:$0xff] %v687
      %694 = vst [vmem:[#allocation3 + $0xc8] sm:$0xff] %v688
      %695 = vst [vmem:[#allocation3 + $0xd0] sm:$0xff] %v689
      %v696 = vld [vmem:[%s165] sm:$0xff]
      %v697 = vld [vmem:[%s165 + $0x8] sm:$0xff]
      %v698 = vld [vmem:[%s165 + $0x10] sm:$0xff]
      %v699 = vld [vmem:[%s165 + $0x18] sm:$0xff]
      %704 = vrot.lane.b32.xlu0 %v696, 90
      %v705 = vpop.permute.xlu0 %704
      %706 = vrot.lane.b32.xlu0 %v697, 90
      %v707 = vpop.permute.xlu0 %706
      %708 = vrot.lane.b32.xlu0 %v698, 90
      %v709 = vpop.permute.xlu0 %708
      %710 = vrot.lane.b32.xlu0 %v699, 90
      %v711 = vpop.permute.xlu0 %710
      %v712 = vsel %vm370, %v705, %v707
      %v713 = vsel %vm370, %v707, %v709
      %v714 = vsel %vm370, %v709, %v711
      %718 = vst [vmem:[#allocation3 + $0xd8] sm:$0xff] %v712
      %719 = vst [vmem:[#allocation3 + $0xe0] sm:$0xff] %v713
      %720 = vst [vmem:[#allocation3 + $0xe8] sm:$0xff] %v714
      %v721 = vld [vmem:[%s1] sm:$0xff]
      %v722 = vld [vmem:[#allocation3] sm:$0xff]
      %v723 = vld [vmem:[#allocation3 + $0x8] sm:$0xff]
      %v724 = vld [vmem:[#allocation3 + $0x10] sm:$0xff]
      %v725 = vld [vmem:[#allocation3 + $0x18] sm:$0xff]
      %v726 = vld [vmem:[#allocation3 + $0x20] sm:$0xff]
      %v727 = vld [vmem:[#allocation3 + $0x28] sm:$0xff]
      %v728 = vld [vmem:[#allocation3 + $0x30] sm:$0xff]
      %v729 = vld [vmem:[#allocation3 + $0x38] sm:$0xff]
      %v730 = vld [vmem:[#allocation3 + $0x40] sm:$0xff]
      %v731 = vld [vmem:[#allocation3 + $0x48] sm:$0xff]
      %v732 = vld [vmem:[#allocation3 + $0x50] sm:$0xff]
      %v733 = vld [vmem:[#allocation3 + $0x58] sm:$0xff]
      %v734 = vld [vmem:[#allocation3 + $0x60] sm:$0xff]
      %v735 = vld [vmem:[#allocation3 + $0x68] sm:$0xff]
      %v736 = vld [vmem:[#allocation3 + $0x70] sm:$0xff]
      %v737 = vld [vmem:[#allocation3 + $0x78] sm:$0xff]
      %v738 = vld [vmem:[#allocation3 + $0x80] sm:$0xff]
      %v739 = vld [vmem:[#allocation3 + $0x88] sm:$0xff]
      %v740 = vld [vmem:[#allocation3 + $0x90] sm:$0xff]
      %v741 = vld [vmem:[#allocation3 + $0x98] sm:$0xff]
      %v742 = vld [vmem:[#allocation3 + $0xa0] sm:$0xff]
      %v743 = vld [vmem:[#allocation3 + $0xa8] sm:$0xff]
      %v744 = vld [vmem:[#allocation3 + $0xb0] sm:$0xff]
      %v745 = vld [vmem:[#allocation3 + $0xb8] sm:$0xff]
      %v746 = vld [vmem:[#allocation3 + $0xc0] sm:$0xff]
      %v747 = vld [vmem:[#allocation3 + $0xc8] sm:$0xff]
      %v748 = vld [vmem:[#allocation3 + $0xd0] sm:$0xff]
      %v749 = vld [vmem:[#allocation3 + $0xd8] sm:$0xff]
      %v750 = vld [vmem:[#allocation3 + $0xe0] sm:$0xff]
      %v751 = vld [vmem:[#allocation3 + $0xe8] sm:$0xff]
      %v752 = vpack.c.bf16 %v725, %v722
      %v753 = vpack.c.bf16 %v726, %v723
      %v754 = vpack.c.bf16 %v727, %v724
      %v755 = vpack.c.bf16 %v731, %v728
      %v756 = vpack.c.bf16 %v732, %v729
      %v757 = vpack.c.bf16 %v733, %v730
      %v758 = vpack.c.bf16 %v737, %v734
      %v759 = vpack.c.bf16 %v738, %v735
      %v760 = vpack.c.bf16 %v739, %v736
      %v761 = vpack.c.bf16 %v743, %v740
      %v762 = vpack.c.bf16 %v744, %v741
      %v763 = vpack.c.bf16 %v745, %v742
      %v764 = vpack.c.bf16 %v749, %v746
      %v765 = vpack.c.bf16 %v750, %v747
      %v766 = vpack.c.bf16 %v751, %v748
      %767 = vset.pattern.permute.xlu0 4
      %768 = vperm.xlu0 %767, %v178
      %v769 = vpop.permute.xlu0 %768
      %v772 = vunpack.c.l.b16 %v721
      %v773 = vunpack.c.h.b16 %v721
      %v774 = vpack.c.b16 %v772, %v772
      %v775 = vpack.c.b16 %v773, %v773
      %776 = vrot.lane.b32.xlu0 %v774, 56
      %v777 = vpop.permute.xlu0 %776
      %778 = vrot.lane.b32.xlu0 %v775, 56
      %v779 = vpop.permute.xlu0 %778
      %vm780 = vcmask 457728
      %v781 = vsel %vm780, %v777, %v779
      %vm782 = vcmask 654336
      %v784 = vsel %vm782, %v781, 0
      %786 = vmatpush.bf16.msra.mxu0 0
      %787 = vmatpush.bf16.msra.mxu0 0
      %788 = vmatpush.bf16.msra.mxu0 0
      %789 = vmatpush.bf16.msra.mxu0 %v764
      %790 = vmatpush.bf16.msra.mxu0 %v761
      %791 = vmatpush.bf16.msra.mxu0 %v758
      %792 = vmatpush.bf16.msra.mxu0 %v755
      %793 = vmatpush.bf16.msra.mxu0 %v752
      %794 = vmatmul.bf16.gmra.mxu0 %v784
      %v795 = vpop.f32.mrf.mxu0
      %v796 = vadd.f32 %v769, %v795
      %v797 = vpop.f32.mrf.mxu0
      %798 = vdwg.mxu0
      %799 = vmatpush.bf16.msra.mxu0 0
      %800 = vmatpush.bf16.msra.mxu0 0
      %801 = vmatpush.bf16.msra.mxu0 0
      %802 = vmatpush.bf16.msra.mxu0 %v765
      %803 = vmatpush.bf16.msra.mxu0 %v762
      %804 = vmatpush.bf16.msra.mxu0 %v759
      %805 = vmatpush.bf16.msra.mxu0 %v756
      %806 = vmatpush.bf16.msra.mxu0 %v753
      %807 = vmatmul.bf16.gmra.mxu0 %v784
      %v808 = vpop.f32.mrf.mxu0
      %v809 = vadd.f32 %v769, %v808
      %v810 = vpop.f32.mrf.mxu0
      %811 = vdwg.mxu0
      %812 = vmatpush.bf16.msra.mxu0 0
      %813 = vmatpush.bf16.msra.mxu0 0
      %814 = vmatpush.bf16.msra.mxu0 0
      %815 = vmatpush.bf16.msra.mxu0 %v766
      %816 = vmatpush.bf16.msra.mxu0 %v763
      %817 = vmatpush.bf16.msra.mxu0 %v760
      %818 = vmatpush.bf16.msra.mxu0 %v757
      %819 = vmatpush.bf16.msra.mxu0 %v754
      %820 = vmatmul.bf16.gmra.mxu0 %v784
      %v821 = vpop.f32.mrf.mxu0
      %v822 = vadd.f32 %v769, %v821
      %v823 = vpop.f32.mrf.mxu0
      %824 = vdwg.mxu0
      %825 = vst [vmem:[%s170] sm:$0xff] %v796
      %826 = vst [vmem:[%s170 + $0x8] sm:$0xff] %v809
      %827 = vst [vmem:[%s170 + $0x10] sm:$0xff] %v822
      %p828 = scmp.lt.s32.totalorder %s14, 1
      %s829 = scalar_select %p828, %s14, 1
      %s830 = smul.addr %s829, 3
      %s831 = smul.addr %s830, 8
      %s832 = scalar_lea.vmem %s3, %s831
      // Predicated region
      $region33: #{residual_block_forward.1} parent=31 // pred_check
        %p833 = pneg %p100
      $region34: #{residual_block_forward.1} parent=31 // pred_check_branch
        %835 = sbr.rel (%p833) target = $region36
      $region35: #{residual_block_forward.1} parent=31 // pred_region
        _
      $region36: #{residual_block_forward.1} parent=31 // pred_fallthru
        _
    $region32: #{residual_block_forward.1} parent=5 // pred_fallthru
      _
    %p836 = scmp.le.s32.totalorder 2, %s9
    // Predicated region
    $region37: #{residual_block_forward.1} parent=5 // pred_check
      %p837 = pneg %p836
    $region38: #{residual_block_forward.1} parent=5 // pred_check_branch
      %839 = sbr.rel (%p837) target = $region40
    $region39: #{residual_block_forward.1} parent=5 // pred_region
      %s840 = ssub.s32 %s9, 2
      // Predicated region
      $region41: #{residual_block_forward.1} parent=39 // pred_check
        %p841 = pneg %p106
      $region42: #{residual_block_forward.1} parent=39 // pred_check_branch
        %843 = sbr.rel (%p841) target = $region44
      $region43: #{residual_block_forward.1} parent=39 // pred_region
        %p844 = scmp.lt.s32.totalorder %s15, 1
        %s845 = scalar_select %p844, %s15, 1
        %s846 = smul.addr %s845, 3
        %s847 = smul.addr %s846, 8
        %s848 = scalar_lea.vmem %s3, %s847
      $region44: #{residual_block_forward.1} parent=39 // pred_fallthru
        _
    $region40: #{residual_block_forward.1} parent=5 // pred_fallthru
      _
  $region6: #{residual_block_forward.1} parent=0 // loop_footer
    %s13 = sadd.s32 1, %s9
  $region7: #{residual_block_forward.1} parent=0 // loop_footer_branch
    %8 = sbr.rel target = $region3
  $region8: #{residual_block_forward.1} parent=0 // loop_exit
    _

</llo_original>
